<compile_context>
chip_gen: v7x
topology: tpu7x:2x2x1
jax: 0.10.0
libtpu: 0.0.40
codegen_flags: <defaults>
</compile_context>

<pallas_src>
import jax
import jax.numpy as jnp
from jax.experimental import pallas as pl
from jax.experimental.pallas import tpu as pltpu

# ---- small, tile-friendly stand-ins for the module's dimensions ----
IN_F  = 512    # stands in for 233*104
H1    = 256    # stands in for 233*20
H2    = 256    # stands in for 233*10
H3    = 256    # stands in for 1500
OUT_F = 128    # stands in for 623 (multiple of 128 -> lane-dense stores)
B     = 16     # demo batch
BMAX  = max(H1, H2, H3, OUT_F)   # packed-bias row width


def policy_kernel(x_ref, w1_ref, w2_ref, w3_hbm, w4_hbm, b_ref,
                  out_ref,
                  w3_buf, w4_buf, dma_sem):
    """Fused 4-layer MLP + softmax on one batch tile.

    w1/w2/biases arrive via the auto-pipeline; w3/w4 are fetched manually so the
    DMA overlaps the first two matmuls.
    """
    # Kick off the layer-3/4 weight fetch immediately (hidden behind L1/L2 compute).
    cp3 = pltpu.make_async_copy(w3_hbm, w3_buf, dma_sem.at[0])
    cp4 = pltpu.make_async_copy(w4_hbm, w4_buf, dma_sem.at[1])
    cp3.start()
    cp4.start()

    def dense(h, w, b):
        # bf16 MXU inputs, f32 accumulation, f32 bias add (VPU work stays f32).
        return jnp.dot(h.astype(jnp.bfloat16), w,
                       preferred_element_type=jnp.float32) + b

    # Unpack the (4, BMAX) packed bias block (static slices -> zero runtime cost).
    b1 = b_ref[0:1, 0:H1]
    b2 = b_ref[1:2, 0:H2]
    b3 = b_ref[2:3, 0:H3]
    b4 = b_ref[3:4, 0:OUT_F]

    h = jnp.maximum(dense(x_ref[...], w1_ref[...], b1), 0.0)   # linear1 + relu
    h = jnp.maximum(dense(h, w2_ref[...], b2), 0.0)            # linear2 + relu

    # dropout(p=0.6): identity in eval mode (inference semantics).
    # TODO(synk): training-mode dropout needs pltpu.prng_seed/prng_random_bits
    # masking plus 1/(1-p) scaling.

    cp3.wait()
    h = jnp.maximum(dense(h, w3_buf[...], b3), 0.0)            # linear3 + relu
    cp4.wait()
    logits = dense(h, w4_buf[...], b4)                         # linear4 (action scores)

    # softmax along dim=1 (features), numerically stable, EXACT normalization
    # (approx reciprocal is not accurate enough for probability consumers).
    m = jnp.max(logits, axis=1, keepdims=True)
    e = jnp.exp(logits - m)
    denom = jnp.sum(e, axis=1, keepdims=True)
    out_ref[...] = (e / denom).astype(out_ref.dtype)


def policy_forward(x, params):
    w1, w2, w3, w4, biases = params
    batch = x.shape[0]
    tb = min(batch, 128)          # raise toward 128/256 for large-batch throughput
    assert batch % tb == 0
    grid = (batch // tb,)

    x = x.astype(jnp.bfloat16)    # halve x HBM->VMEM traffic; MXU eats bf16 anyway

    def resident(shape):
        # Whole-array block with a constant index_map: fetched once, resident
        # across all batch grid steps.
        # NOTE: pipeline_mode=pl.Buffered(1) would drop the unused second buffer,
        # but at ~0.6 MB of bf16 weights it is irrelevant against 64-128 MiB VMEM.
        return pl.BlockSpec(shape, lambda i: tuple(0 for _ in shape))

    return pl.pallas_call(
        policy_kernel,
        out_shape=jax.ShapeDtypeStruct((batch, OUT_F), jnp.float32),
        grid_spec=pltpu.PrefetchScalarGridSpec(
            num_scalar_prefetch=0,
            grid=grid,
            in_specs=[
                pl.BlockSpec((tb, IN_F), lambda i: (i, 0)),   # x batch tile
                resident(w1.shape),                           # w1 (auto-pipeline)
                resident(w2.shape),                           # w2 (auto-pipeline)
                pl.BlockSpec(memory_space=pl.ANY),            # w3 raw HBM (manual DMA)
                pl.BlockSpec(memory_space=pl.ANY),            # w4 raw HBM (manual DMA)
                resident(biases.shape),                       # packed biases
            ],
            out_specs=pl.BlockSpec((tb, OUT_F), lambda i: (i, 0)),
            scratch_shapes=[
                pltpu.VMEM((H2, H3), jnp.bfloat16),           # w3 landing buffer
                pltpu.VMEM((H3, OUT_F), jnp.bfloat16),        # w4 landing buffer
                pltpu.SemaphoreType.DMA((2,)),
            ],
        ),
        compiler_params=pltpu.CompilerParams(
            # Keep "arbitrary": megacore-sharding the batch axis replicates the
            # full weight DMA per TensorCore; only worth it once TB >= 256.
            dimension_semantics=("arbitrary",),
        ),
    )(x, w1, w2, w3, w4, biases)


def init_params(key):
    """torch.nn.Linear-style init U(-1/sqrt(fan_in), +1/sqrt(fan_in)).

    Weights shipped bf16 (HBM traffic), biases packed into one (4, BMAX) f32 array.
    """
    def linear(k, fan_in, fan_out):
        kw, kb = jax.random.split(k)
        bound = 1.0 / jnp.sqrt(float(fan_in))
        w = jax.random.uniform(kw, (fan_in, fan_out), jnp.float32, -bound, bound)
        b = jax.random.uniform(kb, (fan_out,), jnp.float32, -bound, bound)
        return w.astype(jnp.bfloat16), b

    k1, k2, k3, k4 = jax.random.split(key, 4)
    w1, b1 = linear(k1, IN_F, H1)
    w2, b2 = linear(k2, H1, H2)
    w3, b3 = linear(k3, H2, H3)
    w4, b4 = linear(k4, H3, OUT_F)

    biases = jnp.zeros((4, BMAX), jnp.float32)
    biases = biases.at[0, :H1].set(b1)
    biases = biases.at[1, :H2].set(b2)
    biases = biases.at[2, :H3].set(b3)
    biases = biases.at[3, :OUT_F].set(b4)
    return (w1, w2, w3, w4, biases)


def reference_forward(x, params):
    """Pure-JAX reference mirroring the kernel math (bf16 MXU inputs, f32 accum)."""
    w1, w2, w3, w4, biases = params
    b1 = biases[0:1, :H1]
    b2 = biases[1:2, :H2]
    b3 = biases[2:3, :H3]
    b4 = biases[3:4, :OUT_F]

    def dense(h, w, b):
        return jnp.dot(h.astype(jnp.bfloat16), w,
                       preferred_element_type=jnp.float32) + b

    h = jnp.maximum(dense(x, w1, b1), 0.0)
    h = jnp.maximum(dense(h, w2, b2), 0.0)
    h = jnp.maximum(dense(h, w3, b3), 0.0)
    logits = dense(h, w4, b4)
    return jax.nn.softmax(logits, axis=1)


if __name__ == "__main__":
    key = jax.random.PRNGKey(0)
    kx, kp = jax.random.split(key)
    x = jax.random.normal(kx, (B, IN_F), dtype=jnp.float32)
    params = init_params(kp)

    out = jax.block_until_ready(policy_forward(x, params))
    ref = reference_forward(x, params)

    assert out.shape == (B, OUT_F)
    assert bool(jnp.all(jnp.isfinite(out)))
    # exact normalization -> rows sum to 1 within f32 rounding
    assert jnp.allclose(jnp.sum(out, axis=1), 1.0, atol=1e-3)
    # matches the reference (same bf16-at-MXU math) tightly
    assert jnp.allclose(out, ref, atol=2e-3, rtol=2e-2)

    print("KERNEL_OK")
</pallas_src>

<mosaic_0001>
module attributes {stable_mosaic.version = 11 : i64} {
  func.func @policy_kernel(%arg0: i32, %arg1: memref<16x512xbf16, #tpu.memory_space<vmem>>, %arg2: memref<512x256xbf16, #tpu.memory_space<vmem>>, %arg3: memref<256x256xbf16, #tpu.memory_space<vmem>>, %arg4: memref<256x256xbf16, #tpu.memory_space<any>>, %arg5: memref<256x128xbf16, #tpu.memory_space<any>>, %arg6: memref<4x256xf32, #tpu.memory_space<vmem>>, %arg7: memref<16x128xf32, #tpu.memory_space<vmem>>, %arg8: memref<256x256xbf16, #tpu.memory_space<vmem>>, %arg9: memref<256x128xbf16, #tpu.memory_space<vmem>>, %arg10: memref<2x!tpu.dma_semaphore, #tpu.memory_space<semaphore_mem>>) attributes {dimension_semantics = [#tpu.dimension_semantics<arbitrary>], iteration_bounds = array<i64: 1>, scalar_prefetch = 0 : i64, scratch_operands = 3 : i64, tpu.core_type = #tpu.core_type<tc>, window_params = [{transform_indices = @transform_0, window_bounds = array<i64: 16, 512>}, {pipeline_mode = #tpu.pipeline_mode<synchronous>, transform_indices = @transform_1, window_bounds = array<i64: 512, 256>}, {pipeline_mode = #tpu.pipeline_mode<synchronous>, transform_indices = @transform_2, window_bounds = array<i64: 256, 256>}, {}, {}, {pipeline_mode = #tpu.pipeline_mode<synchronous>, transform_indices = @transform_5, window_bounds = array<i64: 4, 256>}, {transform_indices = @transform_6, window_bounds = array<i64: 16, 128>}]} {
    %c0_i32 = arith.constant 0 : i32
    %0 = tpu.memref_slice %arg10[%c0_i32] : memref<2x!tpu.dma_semaphore, #tpu.memory_space<semaphore_mem>> -> memref<1x!tpu.dma_semaphore, #tpu.memory_space<semaphore_mem>>
    %1 = tpu.memref_squeeze %0 : memref<1x!tpu.dma_semaphore, #tpu.memory_space<semaphore_mem>> -> memref<!tpu.dma_semaphore, #tpu.memory_space<semaphore_mem>>
    tpu.enqueue_dma source(%arg4 : memref<256x256xbf16, #tpu.memory_space<any>>) target(%arg8 : memref<256x256xbf16, #tpu.memory_space<vmem>>) target_semaphore(%1 : memref<!tpu.dma_semaphore, #tpu.memory_space<semaphore_mem>>)
    %c1_i32 = arith.constant 1 : i32
    %2 = tpu.memref_slice %arg10[%c1_i32] : memref<2x!tpu.dma_semaphore, #tpu.memory_space<semaphore_mem>> -> memref<1x!tpu.dma_semaphore, #tpu.memory_space<semaphore_mem>>
    %3 = tpu.memref_squeeze %2 : memref<1x!tpu.dma_semaphore, #tpu.memory_space<semaphore_mem>> -> memref<!tpu.dma_semaphore, #tpu.memory_space<semaphore_mem>>
    tpu.enqueue_dma source(%arg5 : memref<256x128xbf16, #tpu.memory_space<any>>) target(%arg9 : memref<256x128xbf16, #tpu.memory_space<vmem>>) target_semaphore(%3 : memref<!tpu.dma_semaphore, #tpu.memory_space<semaphore_mem>>)
    %c0 = arith.constant 0 : index
    %c0_0 = arith.constant 0 : index
    %4 = vector.load %arg6[%c0, %c0_0] : memref<4x256xf32, #tpu.memory_space<vmem>>, vector<1x256xf32>
    %c1 = arith.constant 1 : index
    %c0_1 = arith.constant 0 : index
    %5 = vector.load %arg6[%c1, %c0_1] : memref<4x256xf32, #tpu.memory_space<vmem>>, vector<1x256xf32>
    %c2 = arith.constant 2 : index
    %c0_2 = arith.constant 0 : index
    %6 = vector.load %arg6[%c2, %c0_2] : memref<4x256xf32, #tpu.memory_space<vmem>>, vector<1x256xf32>
    %c3 = arith.constant 3 : index
    %c0_3 = arith.constant 0 : index
    %7 = vector.load %arg6[%c3, %c0_3] : memref<4x256xf32, #tpu.memory_space<vmem>>, vector<1x128xf32>
    %c0_4 = arith.constant 0 : index
    %c0_5 = arith.constant 0 : index
    %8 = vector.load %arg1[%c0_4, %c0_5] : memref<16x512xbf16, #tpu.memory_space<vmem>>, vector<16x512xbf16>
    %c0_6 = arith.constant 0 : index
    %c0_7 = arith.constant 0 : index
    %9 = vector.load %arg2[%c0_6, %c0_7] : memref<512x256xbf16, #tpu.memory_space<vmem>>, vector<512x256xbf16>
    %cst = arith.constant dense<0.000000e+00> : vector<16x256xf32>
    %10 = tpu.matmul %8, %9, %cst {dimension_numbers = #tpu.dot_dimension_numbers<[1], [0], [0], [1], [0, 0, 1, 1], [], []>} : vector<16x512xbf16>, vector<512x256xbf16>, vector<16x256xf32> -> vector<16x256xf32>
    %11 = vector.broadcast %4 : vector<1x256xf32> to vector<16x256xf32>
    %12 = arith.addf %10, %11 : vector<16x256xf32>
    %cst_8 = arith.constant 0.000000e+00 : f32
    %13 = vector.broadcast %cst_8 : f32 to vector<16x256xf32>
    %14 = arith.maximumf %12, %13 : vector<16x256xf32>
    %c0_9 = arith.constant 0 : index
    %c0_10 = arith.constant 0 : index
    %15 = vector.load %arg3[%c0_9, %c0_10] : memref<256x256xbf16, #tpu.memory_space<vmem>>, vector<256x256xbf16>
    %16 = arith.truncf %14 : vector<16x256xf32> to vector<16x256xbf16>
    %cst_11 = arith.constant dense<0.000000e+00> : vector<16x256xf32>
    %17 = tpu.matmul %16, %15, %cst_11 {dimension_numbers = #tpu.dot_dimension_numbers<[1], [0], [0], [1], [0, 0, 1, 1], [], []>} : vector<16x256xbf16>, vector<256x256xbf16>, vector<16x256xf32> -> vector<16x256xf32>
    %18 = vector.broadcast %5 : vector<1x256xf32> to vector<16x256xf32>
    %19 = arith.addf %17, %18 : vector<16x256xf32>
    %cst_12 = arith.constant 0.000000e+00 : f32
    %20 = vector.broadcast %cst_12 : f32 to vector<16x256xf32>
    %21 = arith.maximumf %19, %20 : vector<16x256xf32>
    %c0_i32_13 = arith.constant 0 : i32
    %22 = tpu.memref_slice %arg10[%c0_i32_13] : memref<2x!tpu.dma_semaphore, #tpu.memory_space<semaphore_mem>> -> memref<1x!tpu.dma_semaphore, #tpu.memory_space<semaphore_mem>>
    %23 = tpu.memref_squeeze %22 : memref<1x!tpu.dma_semaphore, #tpu.memory_space<semaphore_mem>> -> memref<!tpu.dma_semaphore, #tpu.memory_space<semaphore_mem>>
    tpu.wait_dma2 semaphore(%23 : memref<!tpu.dma_semaphore, #tpu.memory_space<semaphore_mem>>) src(%arg4 : memref<256x256xbf16, #tpu.memory_space<any>>) dst(%arg8 : memref<256x256xbf16, #tpu.memory_space<vmem>>)
    %c0_14 = arith.constant 0 : index
    %c0_15 = arith.constant 0 : index
    %24 = vector.load %arg8[%c0_14, %c0_15] : memref<256x256xbf16, #tpu.memory_space<vmem>>, vector<256x256xbf16>
    %25 = arith.truncf %21 : vector<16x256xf32> to vector<16x256xbf16>
    %cst_16 = arith.constant dense<0.000000e+00> : vector<16x256xf32>
    %26 = tpu.matmul %25, %24, %cst_16 {dimension_numbers = #tpu.dot_dimension_numbers<[1], [0], [0], [1], [0, 0, 1, 1], [], []>} : vector<16x256xbf16>, vector<256x256xbf16>, vector<16x256xf32> -> vector<16x256xf32>
    %27 = vector.broadcast %6 : vector<1x256xf32> to vector<16x256xf32>
    %28 = arith.addf %26, %27 : vector<16x256xf32>
    %cst_17 = arith.constant 0.000000e+00 : f32
    %29 = vector.broadcast %cst_17 : f32 to vector<16x256xf32>
    %30 = arith.maximumf %28, %29 : vector<16x256xf32>
    %c1_i32_18 = arith.constant 1 : i32
    %31 = tpu.memref_slice %arg10[%c1_i32_18] : memref<2x!tpu.dma_semaphore, #tpu.memory_space<semaphore_mem>> -> memref<1x!tpu.dma_semaphore, #tpu.memory_space<semaphore_mem>>
    %32 = tpu.memref_squeeze %31 : memref<1x!tpu.dma_semaphore, #tpu.memory_space<semaphore_mem>> -> memref<!tpu.dma_semaphore, #tpu.memory_space<semaphore_mem>>
    tpu.wait_dma2 semaphore(%32 : memref<!tpu.dma_semaphore, #tpu.memory_space<semaphore_mem>>) src(%arg5 : memref<256x128xbf16, #tpu.memory_space<any>>) dst(%arg9 : memref<256x128xbf16, #tpu.memory_space<vmem>>)
    %c0_19 = arith.constant 0 : index
    %c0_20 = arith.constant 0 : index
    %33 = vector.load %arg9[%c0_19, %c0_20] : memref<256x128xbf16, #tpu.memory_space<vmem>>, vector<256x128xbf16>
    %34 = arith.truncf %30 : vector<16x256xf32> to vector<16x256xbf16>
    %cst_21 = arith.constant dense<0.000000e+00> : vector<16x128xf32>
    %35 = tpu.matmul %34, %33, %cst_21 {dimension_numbers = #tpu.dot_dimension_numbers<[1], [0], [0], [1], [0, 0, 1, 1], [], []>} : vector<16x256xbf16>, vector<256x128xbf16>, vector<16x128xf32> -> vector<16x128xf32>
    %36 = vector.broadcast %7 : vector<1x128xf32> to vector<16x128xf32>
    %37 = arith.addf %35, %36 : vector<16x128xf32>
    %cst_22 = arith.constant dense<0xFF800000> : vector<16xf32>
    %38 = vector.multi_reduction <maximumf>, %37, %cst_22 [1] : vector<16x128xf32> to vector<16xf32>
    %39 = vector.shape_cast %38 : vector<16xf32> to vector<16x1xf32>
    %40 = vector.broadcast %39 : vector<16x1xf32> to vector<16x128xf32>
    %41 = arith.subf %37, %40 : vector<16x128xf32>
    %42 = math.exp %41 : vector<16x128xf32>
    %cst_23 = arith.constant dense<0.000000e+00> : vector<16xf32>
    %43 = vector.multi_reduction <add>, %42, %cst_23 [1] : vector<16x128xf32> to vector<16xf32>
    %44 = vector.shape_cast %43 : vector<16xf32> to vector<16x1xf32>
    %45 = vector.broadcast %44 : vector<16x1xf32> to vector<16x128xf32>
    %46 = arith.divf %42, %45 : vector<16x128xf32>
    %c0_24 = arith.constant 0 : index
    %c0_25 = arith.constant 0 : index
    %47 = vector.load %arg7[%c0_24, %c0_25] : memref<16x128xf32, #tpu.memory_space<vmem>>, vector<16x128xf32>
    tpu.vector_store %arg7[%c0_24, %c0_25], %46 {strides = array<i32>} : memref<16x128xf32, #tpu.memory_space<vmem>>, vector<16x128xf32>,
    return
  }
  func.func @transform_0(%arg0: i32) -> (i32, i32) {
    %c0_i32 = arith.constant 0 : i32
    %c0_i32_0 = arith.constant 0 : i32
    return %arg0, %c0_i32 : i32, i32
  }
  func.func @transform_1(%arg0: i32) -> (i32, i32) {
    %c0_i32 = arith.constant 0 : i32
    %c0_i32_0 = arith.constant 0 : i32
    %c0_i32_1 = arith.constant 0 : i32
    return %c0_i32, %c0_i32_0 : i32, i32
  }
  func.func @transform_2(%arg0: i32) -> (i32, i32) {
    %c0_i32 = arith.constant 0 : i32
    %c0_i32_0 = arith.constant 0 : i32
    %c0_i32_1 = arith.constant 0 : i32
    return %c0_i32, %c0_i32_0 : i32, i32
  }
  func.func @transform_5(%arg0: i32) -> (i32, i32) {
    %c0_i32 = arith.constant 0 : i32
    %c0_i32_0 = arith.constant 0 : i32
    %c0_i32_1 = arith.constant 0 : i32
    return %c0_i32, %c0_i32_0 : i32, i32
  }
  func.func @transform_6(%arg0: i32) -> (i32, i32) {
    %c0_i32 = arith.constant 0 : i32
    %c0_i32_0 = arith.constant 0 : i32
    return %arg0, %c0_i32 : i32, i32
  }
}

</mosaic_0001>

<llo_original>
// kernel: tpu_custom_call.1
$region0: #{tpu_custom_call.1}
  #allocation0 [shape = 'u32[]', space=smem, size = 0x4, offset = 0x4, fixed_abs, tag = 'smem constant byte address 0x4 - core index']
  #allocation1 [shape = 'u32[144,128]{1,0:T(1,128)}', space=vmem, size = 0x12000, scoped, tag = 'internal scratch']
  #allocation2 [shape = 'bf16[256,256]{1,0:T(16,128)(2,1)}', space=vmem, size = 0x20000, scoped, tag = 'scratch operand']
  #allocation3 [shape = 'bf16[256,128]{1,0:T(16,128)(2,1)}', space=vmem, size = 0x10000, scoped, tag = 'scratch operand']
  #allocation4 [shape = 's32[2]{0}', space=sflag, size = 0x8, scoped, tag = 'scratch operand']
  #allocation12 [shape = 's32[]', space=sflag, size = 0x4, offset = 0, fixed_abs, tag = 'sflag constant byte address 0x0 - dummy sync flag']
  #allocation14 [shape = 's32[]', space=sflag, size = 0x4, offset = 0, fixed_abs, tag = 'sflag constant byte address 0x0 - dummy sync flag']
  #allocation15 [shape = 's32[]', space=sflag, size = 0x4, offset = 0, fixed_abs, tag = 'sflag constant byte address 0x0 - dummy sync flag']
  #allocation16 [shape = 'u32[]', space=smem, size = 0x4, offset = 0x44, fixed_abs, tag = 'smem constant byte address 0x44 - assertion arg 0']
  #allocation17 [shape = 'u32[]', space=smem, size = 0x4, offset = 0x48, fixed_abs, tag = 'smem constant byte address 0x48 - assertion arg 1']
  %s0 = inlined_call_operand.hbm [shape: bf16[16,512], index: 0, kind: input, shape index: {}]
  %s1 = inlined_call_operand.hbm [shape: bf16[512,256], index: 1, kind: input, shape index: {}]
  %s2 = inlined_call_operand.hbm [shape: bf16[256,256], index: 2, kind: input, shape index: {}]
  %s3 = inlined_call_operand.hbm [shape: bf16[256,256], index: 3, kind: input, shape index: {}]
  %s4 = inlined_call_operand.hbm [shape: bf16[256,128], index: 4, kind: input, shape index: {}]
  %s5 = inlined_call_operand.vmem [shape: f32[4,256], index: 5, kind: input, shape index: {}]
  %s6 = inlined_call_operand.hbm [shape: f32[16,128], index: 6, kind: output, shape index: {}]
  %s7 = sld [smem:[#allocation0]]
  $region42: #{tpu_custom_call.1} parent=0
    _
  %s9 = ssub.s32 1, %s7
  %s10 = scalar_select 0, %s9, %s7
  $region1: #{tpu_custom_call.1} parent=0
    #allocation5 [shape = 'u8[16384]{0}', space=vmem, size = 0x4000, scoped, tag = 'input window, operand 0, single buffered']
    #allocation6 [shape = 's32[1]{0}', space=sflag, size = 0x4, scoped, tag = 'scoped memory for tpu_custom_call.1']
    #allocation7 [shape = 's32[1]{0}', space=sflag, size = 0x4, scoped, tag = 'scoped memory for tpu_custom_call.1']
    #allocation8 [shape = 'u8[262144]{0}', space=vmem, size = 0x40000, scoped, tag = 'input window, operand 1, single buffered']
    #allocation9 [shape = 's32[1]{0}', space=sflag, size = 0x4, scoped, tag = 'scoped memory for tpu_custom_call.1']
    #allocation10 [shape = 'u8[131072]{0}', space=vmem, size = 0x20000, scoped, tag = 'input window, operand 2, single buffered']
    #allocation11 [shape = 'u8[8192]{0}', space=vmem, size = 0x2000, scoped, tag = 'output window, operand 0, single buffered']
    #allocation13 [shape = 'u32[9]{0}', space=smem, size = 0x24, scoped, tag = 'DMA stride descriptor']
    %11 = vsyncpa [#allocation6], 0
    %12 = vsyncpa [#allocation9], 0
    %13 = vsyncpa [#allocation7], 0
    // Predicated region
    $region2: #{tpu_custom_call.1} parent=1 // pred_check
      _
    $region3: #{tpu_custom_call.1} parent=1 // pred_check_branch
      %15 = sbr.rel (0) target = $region5
    $region4: #{tpu_custom_call.1} parent=1 // pred_region
      %s17 = ssub.s32 512, 512
      %18 = vsyncadd [#allocation6], %s17
      %s19 = sshll.u32 [#allocation5], 4
      %s20 = int_to_ptr.vmem [resolvable:$true] %s19
      %25 = dma.hbm_to_vmem [thread:$0]  %s0, 512, %s20, [#allocation6], 256, 256, 16
    $region5: #{tpu_custom_call.1} parent=1 // pred_fallthru
      _
    // Predicated region
    $region6: #{tpu_custom_call.1} parent=1 // pred_check
      _
    $region7: #{tpu_custom_call.1} parent=1 // pred_check_branch
      %27 = sbr.rel (0) target = $region9
    $region8: #{tpu_custom_call.1} parent=1 // pred_region
      %s29 = ssub.s32 8192, 8192
      %30 = vsyncadd [#allocation9], %s29
      %s31 = sshll.u32 [#allocation8], 4
      %s32 = int_to_ptr.vmem [resolvable:$true] %s31
      %37 = dma.hbm_to_vmem [thread:$0]  %s1, 8192, %s32, [#allocation9], 128, 128, 8
    $region9: #{tpu_custom_call.1} parent=1 // pred_fallthru
      _
    // Predicated region
    $region10: #{tpu_custom_call.1} parent=1 // pred_check
      _
    $region11: #{tpu_custom_call.1} parent=1 // pred_check_branch
      %39 = sbr.rel (0) target = $region13
    $region12: #{tpu_custom_call.1} parent=1 // pred_region
      %s41 = ssub.s32 4096, 4096
      %42 = vsyncadd [#allocation9], %s41
      %s43 = sshll.u32 [#allocation10], 4
      %s44 = int_to_ptr.vmem [resolvable:$true] %s43
      %49 = dma.hbm_to_vmem [thread:$0]  %s2, 4096, %s44, [#allocation9], 128, 128, 8
    $region13: #{tpu_custom_call.1} parent=1 // pred_fallthru
      _
    // Predicated region
    $region14: #{tpu_custom_call.1} parent=1 // pred_check
      _
    $region15: #{tpu_custom_call.1} parent=1 // pred_check_branch
      %51 = sbr.rel (0) target = $region17
    $region16: #{tpu_custom_call.1} parent=1 // pred_region
      _
    $region17: #{tpu_custom_call.1} parent=1 // pred_fallthru
      _
    // Predicated region
    $region18: #{tpu_custom_call.1} parent=1 // pred_check
      _
    $region19: #{tpu_custom_call.1} parent=1 // pred_check_branch
      %53 = sbr.rel (0) target = $region21
    $region20: #{tpu_custom_call.1} parent=1 // pred_region
      %54 = dma.done [#allocation6], 512
    $region21: #{tpu_custom_call.1} parent=1 // pred_fallthru
      _
    // Predicated region
    $region22: #{tpu_custom_call.1} parent=1 // pred_check
      _
    $region23: #{tpu_custom_call.1} parent=1 // pred_check_branch
      %56 = sbr.rel (0) target = $region25
    $region24: #{tpu_custom_call.1} parent=1 // pred_region
      %57 = dma.done [#allocation9], 8192
    $region25: #{tpu_custom_call.1} parent=1 // pred_fallthru
      _
    // Predicated region
    $region26: #{tpu_custom_call.1} parent=1 // pred_check
      _
    $region27: #{tpu_custom_call.1} parent=1 // pred_check_branch
      %59 = sbr.rel (0) target = $region29
    $region28: #{tpu_custom_call.1} parent=1 // pred_region
      %60 = dma.done [#allocation9], 4096
    $region29: #{tpu_custom_call.1} parent=1 // pred_fallthru
      _
    %s63 = sshll.u32 1, 14
    %s64 = sxor.u32 4294967295, %s63
    %s66 = sld [smem:[#allocation0]]
    %s67 = sadd.s32 2, %s66
    %s69 = sshll.u32 7, 26
    %s70 = sxor.u32 4294967295, %s69
    %s71 = sand.u32 0, %s70
    %s72 = sshll.u32 %s67, 26
    %s73 = sor.u32 %s71, %s72
    %s74 = sshll.u32 [#allocation2], 4
    %s75 = int_to_ptr.vmem [resolvable:$true] %s74
    %78 = sst [smem:[#allocation13]] 256
    %s79 = scalar_lea.smem [#allocation13], 1
    %80 = sst [smem:[%s79]] 256
    %s81 = scalar_lea.smem [#allocation13], 2
    %82 = sst [smem:[%s81]] 2
    %s83 = scalar_lea.smem [#allocation13], 3
    %84 = sst [smem:[%s83]] 64
    %s85 = scalar_lea.smem [#allocation13], 4
    %86 = sst [smem:[%s85]] 128
    %s87 = scalar_lea.smem [#allocation13], 5
    %88 = sst [smem:[%s87]] 2
    %s89 = scalar_lea.smem [#allocation13], 6
    %90 = sst [smem:[%s89]] 128
    %s91 = scalar_lea.smem [#allocation13], 7
    %92 = sst [smem:[%s91]] 64
    %s93 = scalar_lea.smem [#allocation13], 8
    %94 = sst [smem:[%s93]] 4
    %96 = dma.general %s3, 4096, %s75, [#allocation4], [#allocation12], [#allocation13], %s73, 0
    %s97 = scalar_lea.sflag [#allocation4], 1
    // Predicated region
    $region30: #{tpu_custom_call.1} parent=1 // pred_check
      _
    $region31: #{tpu_custom_call.1} parent=1 // pred_check_branch
      %99 = sbr.rel target = $region33
    $region32: #{tpu_custom_call.1} parent=1 // pred_region
      %100 = sst [smem:[#allocation16]] [#allocation15]
      %101 = sst [smem:[#allocation17]] [#allocation14]
    $region33: #{tpu_custom_call.1} parent=1 // pred_fallthru
      _
    %103 = shalt.err (0)
    %s105 = sshll.u32 [#allocation3], 4
    %s106 = int_to_ptr.vmem [resolvable:$true] %s105
    %108 = dma.hbm_to_vmem [thread:$0]  %s4, 2048, %s106, %s97
    %v109 = vld [vmem:[%s5] ss:$4 sm:$0x3]
    %s110 = scalar_lea.vmem %s5, 1
    %v111 = vld [vmem:[%s110] ss:$4 sm:$0x3]
    %s112 = scalar_lea.vmem %s5, 2
    %v113 = vld [vmem:[%s112] ss:$4 sm:$0x3]
    %v114 = vld [vmem:[%s5 + $0x3] sm:$0x1]
    %v115 = vld [vmem:[#allocation5] sm:$0xff]
    %v116 = vld [vmem:[#allocation5 + $0x8] sm:$0xff]
    %v117 = vld [vmem:[#allocation5 + $0x10] sm:$0xff]
    %v118 = vld [vmem:[#allocation5 + $0x18] sm:$0xff]
    %v119 = vld [vmem:[#allocation8] sm:$0xff]
    %v120 = vld [vmem:[#allocation8 + $0x8] sm:$0xff]
    %v121 = vld [vmem:[#allocation8 + $0x10] sm:$0xff]
    %v122 = vld [vmem:[#allocation8 + $0x18] sm:$0xff]
    %v123 = vld [vmem:[#allocation8 + $0x20] sm:$0xff]
    %v124 = vld [vmem:[#allocation8 + $0x28] sm:$0xff]
    %v125 = vld [vmem:[#allocation8 + $0x30] sm:$0xff]
    %v126 = vld [vmem:[#allocation8 + $0x38] sm:$0xff]
    %v127 = vld [vmem:[#allocation8 + $0x40] sm:$0xff]
    %v128 = vld [vmem:[#allocation8 + $0x48] sm:$0xff]
    %v129 = vld [vmem:[#allocation8 + $0x50] sm:$0xff]
    %v130 = vld [vmem:[#allocation8 + $0x58] sm:$0xff]
    %v131 = vld [vmem:[#allocation8 + $0x60] sm:$0xff]
    %v132 = vld [vmem:[#allocation8 + $0x68] sm:$0xff]
    %v133 = vld [vmem:[#allocation8 + $0x70] sm:$0xff]
    %v134 = vld [vmem:[#allocation8 + $0x78] sm:$0xff]
    %v135 = vld [vmem:[#allocation8 + $0x80] sm:$0xff]
    %v136 = vld [vmem:[#allocation8 + $0x88] sm:$0xff]
    %v137 = vld [vmem:[#allocation8 + $0x90] sm:$0xff]
    %v138 = vld [vmem:[#allocation8 + $0x98] sm:$0xff]
    %v139 = vld [vmem:[#allocation8 + $0xa0] sm:$0xff]
    %v140 = vld [vmem:[#allocation8 + $0xa8] sm:$0xff]
    %v141 = vld [vmem:[#allocation8 + $0xb0] sm:$0xff]
    %v142 = vld [vmem:[#allocation8 + $0xb8] sm:$0xff]
    %v143 = vld [vmem:[#allocation8 + $0xc0] sm:$0xff]
    %v144 = vld [vmem:[#allocation8 + $0xc8] sm:$0xff]
    %v145 = vld [vmem:[#allocation8 + $0xd0] sm:$0xff]
    %v146 = vld [vmem:[#allocation8 + $0xd8] sm:$0xff]
    %v147 = vld [vmem:[#allocation8 + $0xe0] sm:$0xff]
    %v148 = vld [vmem:[#allocation8 + $0xe8] sm:$0xff]
    %v149 = vld [vmem:[#allocation8 + $0xf0] sm:$0xff]
    %v150 = vld [vmem:[#allocation8 + $0xf8] sm:$0xff]
    %v151 = vld [vmem:[#allocation8 + $0x100] sm:$0xff]
    %v152 = vld [vmem:[#allocation8 + $0x108] sm:$0xff]
    %v153 = vld [vmem:[#allocation8 + $0x110] sm:$0xff]
    %v154 = vld [vmem:[#allocation8 + $0x118] sm:$0xff]
    %v155 = vld [vmem:[#allocation8 + $0x120] sm:$0xff]
    %v156 = vld [vmem:[#allocation8 + $0x128] sm:$0xff]
    %v157 = vld [vmem:[#allocation8 + $0x130] sm:$0xff]
    %v158 = vld [vmem:[#allocation8 + $0x138] sm:$0xff]
    %v159 = vld [vmem:[#allocation8 + $0x140] sm:$0xff]
    %v160 = vld [vmem:[#allocation8 + $0x148] sm:$0xff]
    %v161 = vld [vmem:[#allocation8 + $0x150] sm:$0xff]
    %v162 = vld [vmem:[#allocation8 + $0x158] sm:$0xff]
    %v163 = vld [vmem:[#allocation8 + $0x160] sm:$0xff]
    %v164 = vld [vmem:[#allocation8 + $0x168] sm:$0xff]
    %v165 = vld [vmem:[#allocation8 + $0x170] sm:$0xff]
    %v166 = vld [vmem:[#allocation8 + $0x178] sm:$0xff]
    %v167 = vld [vmem:[#allocation8 + $0x180] sm:$0xff]
    %v168 = vld [vmem:[#allocation8 + $0x188] sm:$0xff]
    %v169 = vld [vmem:[#allocation8 + $0x190] sm:$0xff]
    %v170 = vld [vmem:[#allocation8 + $0x198] sm:$0xff]
    %v171 = vld [vmem:[#allocation8 + $0x1a0] sm:$0xff]
    %v172 = vld [vmem:[#allocation8 + $0x1a8] sm:$0xff]
    %v173 = vld [vmem:[#allocation8 + $0x1b0] sm:$0xff]
    %v174 = vld [vmem:[#allocation8 + $0x1b8] sm:$0xff]
    %v175 = vld [vmem:[#allocation8 + $0x1c0] sm:$0xff]
    %v176 = vld [vmem:[#allocation8 + $0x1c8] sm:$0xff]
    %v177 = vld [vmem:[#allocation8 + $0x1d0] sm:$0xff]
    %v178 = vld [vmem:[#allocation8 + $0x1d8] sm:$0xff]
    %v179 = vld [vmem:[#allocation8 + $0x1e0] sm:$0xff]
    %v180 = vld [vmem:[#allocation8 + $0x1e8] sm:$0xff]
    %v181 = vld [vmem:[#allocation8 + $0x1f0] sm:$0xff]
    %v182 = vld [vmem:[#allocation8 + $0x1f8] sm:$0xff]
    %v184 = vlaneseq
    %v185 = vshrl.u32 %v184, 7
    %v186 = vsub.s32 0, %v185
    %v187 = vrot.slane %v109, %v186
    %v188 = vlaneseq
    %v189 = vshrl.u32 %v188, 7
    %v190 = vsub.s32 1, %v189
    %v191 = vrot.slane %v109, %v190
    %v198 = vunpack.c.l.b16 %v115
    %v199 = vunpack.c.h.b16 %v115
    %v200 = vunpack.c.l.b16 %v116
    %v201 = vunpack.c.h.b16 %v116
    %v202 = vunpack.c.l.b16 %v117
    %v203 = vunpack.c.h.b16 %v117
    %v204 = vunpack.c.l.b16 %v118
    %v205 = vunpack.c.h.b16 %v118
    %v206 = vpack.c.b16 %v202, %v198
    %v207 = vpack.c.b16 %v203, %v199
    %v208 = vpack.c.b16 %v204, %v200
    %v209 = vpack.c.b16 %v205, %v201
    %v278 = vunpack.c.l.b16 %v119
    %v279 = vunpack.c.h.b16 %v119
    %v280 = vunpack.c.l.b16 %v120
    %v281 = vunpack.c.h.b16 %v120
    %v282 = vunpack.c.l.b16 %v121
    %v283 = vunpack.c.h.b16 %v121
    %v284 = vunpack.c.l.b16 %v122
    %v285 = vunpack.c.h.b16 %v122
    %v286 = vunpack.c.l.b16 %v123
    %v287 = vunpack.c.h.b16 %v123
    %v288 = vunpack.c.l.b16 %v124
    %v289 = vunpack.c.h.b16 %v124
    %v290 = vunpack.c.l.b16 %v125
    %v291 = vunpack.c.h.b16 %v125
    %v292 = vunpack.c.l.b16 %v126
    %v293 = vunpack.c.h.b16 %v126
    %v294 = vunpack.c.l.b16 %v127
    %v295 = vunpack.c.h.b16 %v127
    %v296 = vunpack.c.l.b16 %v128
    %v297 = vunpack.c.h.b16 %v128
    %v298 = vunpack.c.l.b16 %v129
    %v299 = vunpack.c.h.b16 %v129
    %v300 = vunpack.c.l.b16 %v130
    %v301 = vunpack.c.h.b16 %v130
    %v302 = vunpack.c.l.b16 %v131
    %v303 = vunpack.c.h.b16 %v131
    %v304 = vunpack.c.l.b16 %v132
    %v305 = vunpack.c.h.b16 %v132
    %v306 = vunpack.c.l.b16 %v133
    %v307 = vunpack.c.h.b16 %v133
    %v308 = vunpack.c.l.b16 %v134
    %v309 = vunpack.c.h.b16 %v134
    %v310 = vunpack.c.l.b16 %v135
    %v311 = vunpack.c.h.b16 %v135
    %v312 = vunpack.c.l.b16 %v136
    %v313 = vunpack.c.h.b16 %v136
    %v314 = vunpack.c.l.b16 %v137
    %v315 = vunpack.c.h.b16 %v137
    %v316 = vunpack.c.l.b16 %v138
    %v317 = vunpack.c.h.b16 %v138
    %v318 = vunpack.c.l.b16 %v139
    %v319 = vunpack.c.h.b16 %v139
    %v320 = vunpack.c.l.b16 %v140
    %v321 = vunpack.c.h.b16 %v140
    %v322 = vunpack.c.l.b16 %v141
    %v323 = vunpack.c.h.b16 %v141
    %v324 = vunpack.c.l.b16 %v142
    %v325 = vunpack.c.h.b16 %v142
    %v326 = vunpack.c.l.b16 %v143
    %v327 = vunpack.c.h.b16 %v143
    %v328 = vunpack.c.l.b16 %v144
    %v329 = vunpack.c.h.b16 %v144
    %v330 = vunpack.c.l.b16 %v145
    %v331 = vunpack.c.h.b16 %v145
    %v332 = vunpack.c.l.b16 %v146
    %v333 = vunpack.c.h.b16 %v146
    %v334 = vunpack.c.l.b16 %v147
    %v335 = vunpack.c.h.b16 %v147
    %v336 = vunpack.c.l.b16 %v148
    %v337 = vunpack.c.h.b16 %v148
    %v338 = vunpack.c.l.b16 %v149
    %v339 = vunpack.c.h.b16 %v149
    %v340 = vunpack.c.l.b16 %v150
    %v341 = vunpack.c.h.b16 %v150
    %v342 = vunpack.c.l.b16 %v151
    %v343 = vunpack.c.h.b16 %v151
    %v344 = vunpack.c.l.b16 %v152
    %v345 = vunpack.c.h.b16 %v152
    %v346 = vunpack.c.l.b16 %v153
    %v347 = vunpack.c.h.b16 %v153
    %v348 = vunpack.c.l.b16 %v154
    %v349 = vunpack.c.h.b16 %v154
    %v350 = vunpack.c.l.b16 %v155
    %v351 = vunpack.c.h.b16 %v155
    %v352 = vunpack.c.l.b16 %v156
    %v353 = vunpack.c.h.b16 %v156
    %v354 = vunpack.c.l.b16 %v157
    %v355 = vunpack.c.h.b16 %v157
    %v356 = vunpack.c.l.b16 %v158
    %v357 = vunpack.c.h.b16 %v158
    %v358 = vunpack.c.l.b16 %v159
    %v359 = vunpack.c.h.b16 %v159
    %v360 = vunpack.c.l.b16 %v160
    %v361 = vunpack.c.h.b16 %v160
    %v362 = vunpack.c.l.b16 %v161
    %v363 = vunpack.c.h.b16 %v161
    %v364 = vunpack.c.l.b16 %v162
    %v365 = vunpack.c.h.b16 %v162
    %v366 = vunpack.c.l.b16 %v163
    %v367 = vunpack.c.h.b16 %v163
    %v368 = vunpack.c.l.b16 %v164
    %v369 = vunpack.c.h.b16 %v164
    %v370 = vunpack.c.l.b16 %v165
    %v371 = vunpack.c.h.b16 %v165
    %v372 = vunpack.c.l.b16 %v166
    %v373 = vunpack.c.h.b16 %v166
    %v374 = vunpack.c.l.b16 %v167
    %v375 = vunpack.c.h.b16 %v167
    %v376 = vunpack.c.l.b16 %v168
    %v377 = vunpack.c.h.b16 %v168
    %v378 = vunpack.c.l.b16 %v169
    %v379 = vunpack.c.h.b16 %v169
    %v380 = vunpack.c.l.b16 %v170
    %v381 = vunpack.c.h.b16 %v170
    %v382 = vunpack.c.l.b16 %v171
    %v383 = vunpack.c.h.b16 %v171
    %v384 = vunpack.c.l.b16 %v172
    %v385 = vunpack.c.h.b16 %v172
    %v386 = vunpack.c.l.b16 %v173
    %v387 = vunpack.c.h.b16 %v173
    %v388 = vunpack.c.l.b16 %v174
    %v389 = vunpack.c.h.b16 %v174
    %v390 = vunpack.c.l.b16 %v175
    %v391 = vunpack.c.h.b16 %v175
    %v392 = vunpack.c.l.b16 %v176
    %v393 = vunpack.c.h.b16 %v176
    %v394 = vunpack.c.l.b16 %v177
    %v395 = vunpack.c.h.b16 %v177
    %v396 = vunpack.c.l.b16 %v178
    %v397 = vunpack.c.h.b16 %v178
    %v398 = vunpack.c.l.b16 %v179
    %v399 = vunpack.c.h.b16 %v179
    %v400 = vunpack.c.l.b16 %v180
    %v401 = vunpack.c.h.b16 %v180
    %v402 = vunpack.c.l.b16 %v181
    %v403 = vunpack.c.h.b16 %v181
    %v404 = vunpack.c.l.b16 %v182
    %v405 = vunpack.c.h.b16 %v182
    %v406 = vpack.c.b16 %v280, %v278
    %v407 = vpack.c.b16 %v281, %v279
    %v408 = vpack.c.b16 %v284, %v282
    %v409 = vpack.c.b16 %v285, %v283
    %v410 = vpack.c.b16 %v288, %v286
    %v411 = vpack.c.b16 %v289, %v287
    %v412 = vpack.c.b16 %v292, %v290
    %v413 = vpack.c.b16 %v293, %v291
    %v414 = vpack.c.b16 %v296, %v294
    %v415 = vpack.c.b16 %v297, %v295
    %v416 = vpack.c.b16 %v300, %v298
    %v417 = vpack.c.b16 %v301, %v299
    %v418 = vpack.c.b16 %v304, %v302
    %v419 = vpack.c.b16 %v305, %v303
    %v420 = vpack.c.b16 %v308, %v306
    %v421 = vpack.c.b16 %v309, %v307
    %v422 = vpack.c.b16 %v312, %v310
    %v423 = vpack.c.b16 %v313, %v311
    %v424 = vpack.c.b16 %v316, %v314
    %v425 = vpack.c.b16 %v317, %v315
    %v426 = vpack.c.b16 %v320, %v318
    %v427 = vpack.c.b16 %v321, %v319
    %v428 = vpack.c.b16 %v324, %v322
    %v429 = vpack.c.b16 %v325, %v323
    %v430 = vpack.c.b16 %v328, %v326
    %v431 = vpack.c.b16 %v329, %v327
    %v432 = vpack.c.b16 %v332, %v330
    %v433 = vpack.c.b16 %v333, %v331
    %v434 = vpack.c.b16 %v336, %v334
    %v435 = vpack.c.b16 %v337, %v335
    %v436 = vpack.c.b16 %v340, %v338
    %v437 = vpack.c.b16 %v341, %v339
    %v438 = vpack.c.b16 %v344, %v342
    %v439 = vpack.c.b16 %v345, %v343
    %v440 = vpack.c.b16 %v348, %v346
    %v441 = vpack.c.b16 %v349, %v347
    %v442 = vpack.c.b16 %v352, %v350
    %v443 = vpack.c.b16 %v353, %v351
    %v444 = vpack.c.b16 %v356, %v354
    %v445 = vpack.c.b16 %v357, %v355
    %v446 = vpack.c.b16 %v360, %v358
    %v447 = vpack.c.b16 %v361, %v359
    %v448 = vpack.c.b16 %v364, %v362
    %v449 = vpack.c.b16 %v365, %v363
    %v450 = vpack.c.b16 %v368, %v366
    %v451 = vpack.c.b16 %v369, %v367
    %v452 = vpack.c.b16 %v372, %v370
    %v453 = vpack.c.b16 %v373, %v371
    %v454 = vpack.c.b16 %v376, %v374
    %v455 = vpack.c.b16 %v377, %v375
    %v456 = vpack.c.b16 %v380, %v378
    %v457 = vpack.c.b16 %v381, %v379
    %v458 = vpack.c.b16 %v384, %v382
    %v459 = vpack.c.b16 %v385, %v383
    %v460 = vpack.c.b16 %v388, %v386
    %v461 = vpack.c.b16 %v389, %v387
    %v462 = vpack.c.b16 %v392, %v390
    %v463 = vpack.c.b16 %v393, %v391
    %v464 = vpack.c.b16 %v396, %v394
    %v465 = vpack.c.b16 %v397, %v395
    %v466 = vpack.c.b16 %v400, %v398
    %v467 = vpack.c.b16 %v401, %v399
    %v468 = vpack.c.b16 %v404, %v402
    %v469 = vpack.c.b16 %v405, %v403
    %534 = vmatprep.subr.bf16.mxu0 %v407
    %535 = vmatpush1.bf16.msra.mxu0 %v406
    %536 = vmatprep.subr.bf16.mxu0 %v409
    %537 = vmatpush1.bf16.msra.mxu0 %v408
    %538 = vmatprep.subr.bf16.mxu0 %v411
    %539 = vmatpush1.bf16.msra.mxu0 %v410
    %540 = vmatprep.subr.bf16.mxu0 %v413
    %541 = vmatpush1.bf16.msra.mxu0 %v412
    %542 = vmatprep.subr.bf16.mxu0 %v415
    %543 = vmatpush1.bf16.msra.mxu0 %v414
    %544 = vmatprep.subr.bf16.mxu0 %v417
    %545 = vmatpush1.bf16.msra.mxu0 %v416
    %546 = vmatprep.subr.bf16.mxu0 %v419
    %547 = vmatpush1.bf16.msra.mxu0 %v418
    %548 = vmatprep.subr.bf16.mxu0 %v421
    %549 = vmatpush1.bf16.msra.mxu0 %v420
    %550 = vmatprep.subr.bf16.mxu0 %v423
    %551 = vmatpush1.bf16.msra.mxu0 %v422
    %552 = vmatprep.subr.bf16.mxu0 %v425
    %553 = vmatpush1.bf16.msra.mxu0 %v424
    %554 = vmatprep.subr.bf16.mxu0 %v427
    %555 = vmatpush1.bf16.msra.mxu0 %v426
    %556 = vmatprep.subr.bf16.mxu0 %v429
    %557 = vmatpush1.bf16.msra.mxu0 %v428
    %558 = vmatprep.subr.bf16.mxu0 %v431
    %559 = vmatpush1.bf16.msra.mxu0 %v430
    %560 = vmatprep.subr.bf16.mxu0 %v433
    %561 = vmatpush1.bf16.msra.mxu0 %v432
    %562 = vmatprep.subr.bf16.mxu0 %v435
    %563 = vmatpush1.bf16.msra.mxu0 %v434
    %564 = vmatprep.subr.bf16.mxu0 %v437
    %565 = vmatpush1.bf16.msra.mxu0 %v436
    %566 = vmatprep.mubr.bf16.mxu0 %v207
    %567 = vmatmul.mubr.bf16.gmra.mrb[0].mxu0 %v206
    %v568 = vpop.f32.mrb[0].mxu0
    %v569 = vadd.f32 %v187, %v568
    %v570 = vpop.f32.mrb[0].mxu0
    %v571 = vadd.f32 %v191, %v570
    %v572 = vpop.f32.mrb[0].mxu0
    %v573 = vadd.f32 %v187, %v572
    %v574 = vpop.f32.mrb[0].mxu0
    %v575 = vadd.f32 %v191, %v574
    %576 = vdwg.mxu0
    %577 = vmatprep.subr.bf16.mxu0 %v439
    %578 = vmatpush1.bf16.msra.mxu0 %v438
    %579 = vmatprep.subr.bf16.mxu0 %v441
    %580 = vmatpush1.bf16.msra.mxu0 %v440
    %581 = vmatprep.subr.bf16.mxu0 %v443
    %582 = vmatpush1.bf16.msra.mxu0 %v442
    %583 = vmatprep.subr.bf16.mxu0 %v445
    %584 = vmatpush1.bf16.msra.mxu0 %v444
    %585 = vmatprep.subr.bf16.mxu0 %v447
    %586 = vmatpush1.bf16.msra.mxu0 %v446
    %587 = vmatprep.subr.bf16.mxu0 %v449
    %588 = vmatpush1.bf16.msra.mxu0 %v448
    %589 = vmatprep.subr.bf16.mxu0 %v451
    %590 = vmatpush1.bf16.msra.mxu0 %v450
    %591 = vmatprep.subr.bf16.mxu0 %v453
    %592 = vmatpush1.bf16.msra.mxu0 %v452
    %593 = vmatprep.subr.bf16.mxu0 %v455
    %594 = vmatpush1.bf16.msra.mxu0 %v454
    %595 = vmatprep.subr.bf16.mxu0 %v457
    %596 = vmatpush1.bf16.msra.mxu0 %v456
    %597 = vmatprep.subr.bf16.mxu0 %v459
    %598 = vmatpush1.bf16.msra.mxu0 %v458
    %599 = vmatprep.subr.bf16.mxu0 %v461
    %600 = vmatpush1.bf16.msra.mxu0 %v460
    %601 = vmatprep.subr.bf16.mxu0 %v463
    %602 = vmatpush1.bf16.msra.mxu0 %v462
    %603 = vmatprep.subr.bf16.mxu0 %v465
    %604 = vmatpush1.bf16.msra.mxu0 %v464
    %605 = vmatprep.subr.bf16.mxu0 %v467
    %606 = vmatpush1.bf16.msra.mxu0 %v466
    %607 = vmatprep.subr.bf16.mxu0 %v469
    %608 = vmatpush1.bf16.msra.mxu0 %v468
    %609 = vmatprep.mubr.bf16.mxu0 %v209
    %610 = vmatmul.mubr.bf16.gmra.mrb[0].mxu0 %v208
    %v611 = vpop.f32.mrb[0].mxu0
    %v612 = vadd.f32 %v569, %v611
    %v613 = vpop.f32.mrb[0].mxu0
    %v614 = vadd.f32 %v571, %v613
    %v615 = vpop.f32.mrb[0].mxu0
    %v616 = vadd.f32 %v573, %v615
    %v617 = vpop.f32.mrb[0].mxu0
    %v618 = vadd.f32 %v575, %v617
    %619 = vdwg.mxu0
    %v620 = vmax.f32 %v612, 0.0
    %v621 = vmax.f32 %v614, 0.0
    %v622 = vmax.f32 %v616, 0.0
    %v623 = vmax.f32 %v618, 0.0
    %v624 = vld [vmem:[#allocation10] sm:$0xff]
    %v625 = vld [vmem:[#allocation10 + $0x8] sm:$0xff]
    %v626 = vld [vmem:[#allocation10 + $0x10] sm:$0xff]
    %v627 = vld [vmem:[#allocation10 + $0x18] sm:$0xff]
    %v628 = vld [vmem:[#allocation10 + $0x20] sm:$0xff]
    %v629 = vld [vmem:[#allocation10 + $0x28] sm:$0xff]
    %v630 = vld [vmem:[#allocation10 + $0x30] sm:$0xff]
    %v631 = vld [vmem:[#allocation10 + $0x38] sm:$0xff]
    %v632 = vld [vmem:[#allocation10 + $0x40] sm:$0xff]
    %v633 = vld [vmem:[#allocation10 + $0x48] sm:$0xff]
    %v634 = vld [vmem:[#allocation10 + $0x50] sm:$0xff]
    %v635 = vld [vmem:[#allocation10 + $0x58] sm:$0xff]
    %v636 = vld [vmem:[#allocation10 + $0x60] sm:$0xff]
    %v637 = vld [vmem:[#allocation10 + $0x68] sm:$0xff]
    %v638 = vld [vmem:[#allocation10 + $0x70] sm:$0xff]
    %v639 = vld [vmem:[#allocation10 + $0x78] sm:$0xff]
    %v640 = vld [vmem:[#allocation10 + $0x80] sm:$0xff]
    %v641 = vld [vmem:[#allocation10 + $0x88] sm:$0xff]
    %v642 = vld [vmem:[#allocation10 + $0x90] sm:$0xff]
    %v643 = vld [vmem:[#allocation10 + $0x98] sm:$0xff]
    %v644 = vld [vmem:[#allocation10 + $0xa0] sm:$0xff]
    %v645 = vld [vmem:[#allocation10 + $0xa8] sm:$0xff]
    %v646 = vld [vmem:[#allocation10 + $0xb0] sm:$0xff]
    %v647 = vld [vmem:[#allocation10 + $0xb8] sm:$0xff]
    %v648 = vld [vmem:[#allocation10 + $0xc0] sm:$0xff]
    %v649 = vld [vmem:[#allocation10 + $0xc8] sm:$0xff]
    %v650 = vld [vmem:[#allocation10 + $0xd0] sm:$0xff]
    %v651 = vld [vmem:[#allocation10 + $0xd8] sm:$0xff]
    %v652 = vld [vmem:[#allocation10 + $0xe0] sm:$0xff]
    %v653 = vld [vmem:[#allocation10 + $0xe8] sm:$0xff]
    %v654 = vld [vmem:[#allocation10 + $0xf0] sm:$0xff]
    %v655 = vld [vmem:[#allocation10 + $0xf8] sm:$0xff]
    %v656 = vpack.c.bf16 %v622, %v620
    %v657 = vpack.c.bf16 %v623, %v621
    %v659 = vlaneseq
    %v660 = vshrl.u32 %v659, 7
    %v661 = vsub.s32 0, %v660
    %v662 = vrot.slane %v111, %v661
    %v663 = vlaneseq
    %v664 = vshrl.u32 %v663, 7
    %v665 = vsub.s32 1, %v664
    %v666 = vrot.slane %v111, %v665
    %v701 = vunpack.c.l.b16 %v624
    %v702 = vunpack.c.h.b16 %v624
    %v703 = vunpack.c.l.b16 %v625
    %v704 = vunpack.c.h.b16 %v625
    %v705 = vunpack.c.l.b16 %v626
    %v706 = vunpack.c.h.b16 %v626
    %v707 = vunpack.c.l.b16 %v627
    %v708 = vunpack.c.h.b16 %v627
    %v709 = vunpack.c.l.b16 %v628
    %v710 = vunpack.c.h.b16 %v628
    %v711 = vunpack.c.l.b16 %v629
    %v712 = vunpack.c.h.b16 %v629
    %v713 = vunpack.c.l.b16 %v630
    %v714 = vunpack.c.h.b16 %v630
    %v715 = vunpack.c.l.b16 %v631
    %v716 = vunpack.c.h.b16 %v631
    %v717 = vunpack.c.l.b16 %v632
    %v718 = vunpack.c.h.b16 %v632
    %v719 = vunpack.c.l.b16 %v633
    %v720 = vunpack.c.h.b16 %v633
    %v721 = vunpack.c.l.b16 %v634
    %v722 = vunpack.c.h.b16 %v634
    %v723 = vunpack.c.l.b16 %v635
    %v724 = vunpack.c.h.b16 %v635
    %v725 = vunpack.c.l.b16 %v636
    %v726 = vunpack.c.h.b16 %v636
    %v727 = vunpack.c.l.b16 %v637
    %v728 = vunpack.c.h.b16 %v637
    %v729 = vunpack.c.l.b16 %v638
    %v730 = vunpack.c.h.b16 %v638
    %v731 = vunpack.c.l.b16 %v639
    %v732 = vunpack.c.h.b16 %v639
    %v733 = vunpack.c.l.b16 %v640
    %v734 = vunpack.c.h.b16 %v640
    %v735 = vunpack.c.l.b16 %v641
    %v736 = vunpack.c.h.b16 %v641
    %v737 = vunpack.c.l.b16 %v642
    %v738 = vunpack.c.h.b16 %v642
    %v739 = vunpack.c.l.b16 %v643
    %v740 = vunpack.c.h.b16 %v643
    %v741 = vunpack.c.l.b16 %v644
    %v742 = vunpack.c.h.b16 %v644
    %v743 = vunpack.c.l.b16 %v645
    %v744 = vunpack.c.h.b16 %v645
    %v745 = vunpack.c.l.b16 %v646
    %v746 = vunpack.c.h.b16 %v646
    %v747 = vunpack.c.l.b16 %v647
    %v748 = vunpack.c.h.b16 %v647
    %v749 = vunpack.c.l.b16 %v648
    %v750 = vunpack.c.h.b16 %v648
    %v751 = vunpack.c.l.b16 %v649
    %v752 = vunpack.c.h.b16 %v649
    %v753 = vunpack.c.l.b16 %v650
    %v754 = vunpack.c.h.b16 %v650
    %v755 = vunpack.c.l.b16 %v651
    %v756 = vunpack.c.h.b16 %v651
    %v757 = vunpack.c.l.b16 %v652
    %v758 = vunpack.c.h.b16 %v652
    %v759 = vunpack.c.l.b16 %v653
    %v760 = vunpack.c.h.b16 %v653
    %v761 = vunpack.c.l.b16 %v654
    %v762 = vunpack.c.h.b16 %v654
    %v763 = vunpack.c.l.b16 %v655
    %v764 = vunpack.c.h.b16 %v655
    %v765 = vpack.c.b16 %v703, %v701
    %v766 = vpack.c.b16 %v704, %v702
    %v767 = vpack.c.b16 %v707, %v705
    %v768 = vpack.c.b16 %v708, %v706
    %v769 = vpack.c.b16 %v711, %v709
    %v770 = vpack.c.b16 %v712, %v710
    %v771 = vpack.c.b16 %v715, %v713
    %v772 = vpack.c.b16 %v716, %v714
    %v773 = vpack.c.b16 %v719, %v717
    %v774 = vpack.c.b16 %v720, %v718
    %v775 = vpack.c.b16 %v723, %v721
    %v776 = vpack.c.b16 %v724, %v722
    %v777 = vpack.c.b16 %v727, %v725
    %v778 = vpack.c.b16 %v728, %v726
    %v779 = vpack.c.b16 %v731, %v729
    %v780 = vpack.c.b16 %v732, %v730
    %v781 = vpack.c.b16 %v735, %v733
    %v782 = vpack.c.b16 %v736, %v734
    %v783 = vpack.c.b16 %v739, %v737
    %v784 = vpack.c.b16 %v740, %v738
    %v785 = vpack.c.b16 %v743, %v741
    %v786 = vpack.c.b16 %v744, %v742
    %v787 = vpack.c.b16 %v747, %v745
    %v788 = vpack.c.b16 %v748, %v746
    %v789 = vpack.c.b16 %v751, %v749
    %v790 = vpack.c.b16 %v752, %v750
    %v791 = vpack.c.b16 %v755, %v753
    %v792 = vpack.c.b16 %v756, %v754
    %v793 = vpack.c.b16 %v759, %v757
    %v794 = vpack.c.b16 %v760, %v758
    %v795 = vpack.c.b16 %v763, %v761
    %v796 = vpack.c.b16 %v764, %v762
    %829 = vmatprep.subr.bf16.mxu0 %v766
    %830 = vmatpush1.bf16.msra.mxu0 %v765
    %831 = vmatprep.subr.bf16.mxu0 %v768
    %832 = vmatpush1.bf16.msra.mxu0 %v767
    %833 = vmatprep.subr.bf16.mxu0 %v770
    %834 = vmatpush1.bf16.msra.mxu0 %v769
    %835 = vmatprep.subr.bf16.mxu0 %v772
    %836 = vmatpush1.bf16.msra.mxu0 %v771
    %837 = vmatprep.subr.bf16.mxu0 %v774
    %838 = vmatpush1.bf16.msra.mxu0 %v773
    %839 = vmatprep.subr.bf16.mxu0 %v776
    %840 = vmatpush1.bf16.msra.mxu0 %v775
    %841 = vmatprep.subr.bf16.mxu0 %v778
    %842 = vmatpush1.bf16.msra.mxu0 %v777
    %843 = vmatprep.subr.bf16.mxu0 %v780
    %844 = vmatpush1.bf16.msra.mxu0 %v779
    %845 = vmatprep.subr.bf16.mxu0 %v782
    %846 = vmatpush1.bf16.msra.mxu0 %v781
    %847 = vmatprep.subr.bf16.mxu0 %v784
    %848 = vmatpush1.bf16.msra.mxu0 %v783
    %849 = vmatprep.subr.bf16.mxu0 %v786
    %850 = vmatpush1.bf16.msra.mxu0 %v785
    %851 = vmatprep.subr.bf16.mxu0 %v788
    %852 = vmatpush1.bf16.msra.mxu0 %v787
    %853 = vmatprep.subr.bf16.mxu0 %v790
    %854 = vmatpush1.bf16.msra.mxu0 %v789
    %855 = vmatprep.subr.bf16.mxu0 %v792
    %856 = vmatpush1.bf16.msra.mxu0 %v791
    %857 = vmatprep.subr.bf16.mxu0 %v794
    %858 = vmatpush1.bf16.msra.mxu0 %v793
    %859 = vmatprep.subr.bf16.mxu0 %v796
    %860 = vmatpush1.bf16.msra.mxu0 %v795
    %861 = vmatprep.mubr.bf16.mxu0 %v657
    %862 = vmatmul.mubr.bf16.gmra.mrb[0].mxu0 %v656
    %v863 = vpop.f32.mrb[0].mxu0
    %v864 = vadd.f32 %v662, %v863
    %v865 = vpop.f32.mrb[0].mxu0
    %v866 = vadd.f32 %v666, %v865
    %v867 = vpop.f32.mrb[0].mxu0
    %v868 = vadd.f32 %v662, %v867
    %v869 = vpop.f32.mrb[0].mxu0
    %v870 = vadd.f32 %v666, %v869
    %871 = vdwg.mxu0
    %v872 = vmax.f32 %v864, 0.0
    %v873 = vmax.f32 %v866, 0.0
    %v874 = vmax.f32 %v868, 0.0
    %v875 = vmax.f32 %v870, 0.0
    %s876 = smul.u32 4, 32
    %s877 = smul.u32 %s876, 2
    %s878 = sshll.u32 %s877, 4
    %879 = dma.done [#allocation4], %s878
    %v880 = vld [vmem:[#allocation2] sm:$0xff]
    %v881 = vld [vmem:[#allocation2 + $0x8] sm:$0xff]
    %v882 = vld [vmem:[#allocation2 + $0x10] sm:$0xff]
    %v883 = vld [vmem:[#allocation2 + $0x18] sm:$0xff]
    %v884 = vld [vmem:[#allocation2 + $0x20] sm:$0xff]
    %v885 = vld [vmem:[#allocation2 + $0x28] sm:$0xff]
    %v886 = vld [vmem:[#allocation2 + $0x30] sm:$0xff]
    %v887 = vld [vmem:[#allocation2 + $0x38] sm:$0xff]
    %v888 = vld [vmem:[#allocation2 + $0x40] sm:$0xff]
    %v889 = vld [vmem:[#allocation2 + $0x48] sm:$0xff]
    %v890 = vld [vmem:[#allocation2 + $0x50] sm:$0xff]
    %v891 = vld [vmem:[#allocation2 + $0x58] sm:$0xff]
    %v892 = vld [vmem:[#allocation2 + $0x60] sm:$0xff]
    %v893 = vld [vmem:[#allocation2 + $0x68] sm:$0xff]
    %v894 = vld [vmem:[#allocation2 + $0x70] sm:$0xff]
    %v895 = vld [vmem:[#allocation2 + $0x78] sm:$0xff]
    %v896 = vld [vmem:[#allocation2 + $0x80] sm:$0xff]
    %v897 = vld [vmem:[#allocation2 + $0x88] sm:$0xff]
    %v898 = vld [vmem:[#allocation2 + $0x90] sm:$0xff]
    %v899 = vld [vmem:[#allocation2 + $0x98] sm:$0xff]
    %v900 = vld [vmem:[#allocation2 + $0xa0] sm:$0xff]
    %v901 = vld [vmem:[#allocation2 + $0xa8] sm:$0xff]
    %v902 = vld [vmem:[#allocation2 + $0xb0] sm:$0xff]
    %v903 = vld [vmem:[#allocation2 + $0xb8] sm:$0xff]
    %v904 = vld [vmem:[#allocation2 + $0xc0] sm:$0xff]
    %v905 = vld [vmem:[#allocation2 + $0xc8] sm:$0xff]
    %v906 = vld [vmem:[#allocation2 + $0xd0] sm:$0xff]
    %v907 = vld [vmem:[#allocation2 + $0xd8] sm:$0xff]
    %v908 = vld [vmem:[#allocation2 + $0xe0] sm:$0xff]
    %v909 = vld [vmem:[#allocation2 + $0xe8] sm:$0xff]
    %v910 = vld [vmem:[#allocation2 + $0xf0] sm:$0xff]
    %v911 = vld [vmem:[#allocation2 + $0xf8] sm:$0xff]
    %v912 = vpack.c.bf16 %v874, %v872
    %v913 = vpack.c.bf16 %v875, %v873
    %v915 = vlaneseq
    %v916 = vshrl.u32 %v915, 7
    %v917 = vsub.s32 0, %v916
    %v918 = vrot.slane %v113, %v917
    %v919 = vlaneseq
    %v920 = vshrl.u32 %v919, 7
    %v921 = vsub.s32 1, %v920
    %v922 = vrot.slane %v113, %v921
    %925 = vmatprep.subr.bf16.mxu0 %v881
    %926 = vmatpush1.bf16.msra.mxu0 %v880
    %927 = vmatprep.subr.bf16.mxu0 %v883
    %928 = vmatpush1.bf16.msra.mxu0 %v882
    %929 = vmatprep.subr.bf16.mxu0 %v885
    %930 = vmatpush1.bf16.msra.mxu0 %v884
    %931 = vmatprep.subr.bf16.mxu0 %v887
    %932 = vmatpush1.bf16.msra.mxu0 %v886
    %933 = vmatprep.subr.bf16.mxu0 %v889
    %934 = vmatpush1.bf16.msra.mxu0 %v888
    %935 = vmatprep.subr.bf16.mxu0 %v891
    %936 = vmatpush1.bf16.msra.mxu0 %v890
    %937 = vmatprep.subr.bf16.mxu0 %v893
    %938 = vmatpush1.bf16.msra.mxu0 %v892
    %939 = vmatprep.subr.bf16.mxu0 %v895
    %940 = vmatpush1.bf16.msra.mxu0 %v894
    %941 = vmatprep.subr.bf16.mxu0 %v897
    %942 = vmatpush1.bf16.msra.mxu0 %v896
    %943 = vmatprep.subr.bf16.mxu0 %v899
    %944 = vmatpush1.bf16.msra.mxu0 %v898
    %945 = vmatprep.subr.bf16.mxu0 %v901
    %946 = vmatpush1.bf16.msra.mxu0 %v900
    %947 = vmatprep.subr.bf16.mxu0 %v903
    %948 = vmatpush1.bf16.msra.mxu0 %v902
    %949 = vmatprep.subr.bf16.mxu0 %v905
    %950 = vmatpush1.bf16.msra.mxu0 %v904
    %951 = vmatprep.subr.bf16.mxu0 %v907
    %952 = vmatpush1.bf16.msra.mxu0 %v906
    %953 = vmatprep.subr.bf16.mxu0 %v909
    %954 = vmatpush1.bf16.msra.mxu0 %v908
    %955 = vmatprep.subr.bf16.mxu0 %v911
    %956 = vmatpush1.bf16.msra.mxu0 %v910
    %957 = vmatprep.mubr.bf16.mxu0 %v913
    %958 = vmatmul.mubr.bf16.gmra.mrb[0].mxu0 %v912
    %v959 = vpop.f32.mrb[0].mxu0
    %v960 = vadd.f32 %v918, %v959
    %v961 = vpop.f32.mrb[0].mxu0
    %v962 = vadd.f32 %v922, %v961
    %v963 = vpop.f32.mrb[0].mxu0
    %v964 = vadd.f32 %v918, %v963
    %v965 = vpop.f32.mrb[0].mxu0
    %v966 = vadd.f32 %v922, %v965
    %967 = vdwg.mxu0
    %v968 = vmax.f32 %v960, 0.0
    %v969 = vmax.f32 %v962, 0.0
    %v970 = vmax.f32 %v964, 0.0
    %v971 = vmax.f32 %v966, 0.0
    %s972 = smul.u32 %s876, 1
    %s973 = sshll.u32 %s972, 4
    %974 = dma.done %s97, %s973
    %v975 = vld [vmem:[#allocation3] sm:$0xff]
    %v976 = vld [vmem:[#allocation3 + $0x8] sm:$0xff]
    %v977 = vld [vmem:[#allocation3 + $0x10] sm:$0xff]
    %v978 = vld [vmem:[#allocation3 + $0x18] sm:$0xff]
    %v979 = vld [vmem:[#allocation3 + $0x20] sm:$0xff]
    %v980 = vld [vmem:[#allocation3 + $0x28] sm:$0xff]
    %v981 = vld [vmem:[#allocation3 + $0x30] sm:$0xff]
    %v982 = vld [vmem:[#allocation3 + $0x38] sm:$0xff]
    %v983 = vld [vmem:[#allocation3 + $0x40] sm:$0xff]
    %v984 = vld [vmem:[#allocation3 + $0x48] sm:$0xff]
    %v985 = vld [vmem:[#allocation3 + $0x50] sm:$0xff]
    %v986 = vld [vmem:[#allocation3 + $0x58] sm:$0xff]
    %v987 = vld [vmem:[#allocation3 + $0x60] sm:$0xff]
    %v988 = vld [vmem:[#allocation3 + $0x68] sm:$0xff]
    %v989 = vld [vmem:[#allocation3 + $0x70] sm:$0xff]
    %v990 = vld [vmem:[#allocation3 + $0x78] sm:$0xff]
    %v991 = vpack.c.bf16 %v970, %v968
    %v992 = vpack.c.bf16 %v971, %v969
    %v993 = vlaneseq
    %v994 = vshrl.u32 %v993, 7
    %v995 = vsub.s32 0, %v994
    %v996 = vrot.slane %v114, %v995
    %997 = vmatprep.subr.bf16.mxu0 0
    %998 = vmatpush1.bf16.msra.mxu0 %v975
    %999 = vmatprep.subr.bf16.mxu0 0
    %1000 = vmatpush1.bf16.msra.mxu0 %v976
    %1001 = vmatprep.subr.bf16.mxu0 0
    %1002 = vmatpush1.bf16.msra.mxu0 %v977
    %1003 = vmatprep.subr.bf16.mxu0 0
    %1004 = vmatpush1.bf16.msra.mxu0 %v978
    %1005 = vmatprep.subr.bf16.mxu0 0
    %1006 = vmatpush1.bf16.msra.mxu0 %v979
    %1007 = vmatprep.subr.bf16.mxu0 0
    %1008 = vmatpush1.bf16.msra.mxu0 %v980
    %1009 = vmatprep.subr.bf16.mxu0 0
    %1010 = vmatpush1.bf16.msra.mxu0 %v981
    %1011 = vmatprep.subr.bf16.mxu0 0
    %1012 = vmatpush1.bf16.msra.mxu0 %v982
    %1013 = vmatprep.subr.bf16.mxu0 0
    %1014 = vmatpush1.bf16.msra.mxu0 %v983
    %1015 = vmatprep.subr.bf16.mxu0 0
    %1016 = vmatpush1.bf16.msra.mxu0 %v984
    %1017 = vmatprep.subr.bf16.mxu0 0
    %1018 = vmatpush1.bf16.msra.mxu0 %v985
    %1019 = vmatprep.subr.bf16.mxu0 0
    %1020 = vmatpush1.bf16.msra.mxu0 %v986
    %1021 = vmatprep.subr.bf16.mxu0 0
    %1022 = vmatpush1.bf16.msra.mxu0 %v987
    %1023 = vmatprep.subr.bf16.mxu0 0
    %1024 = vmatpush1.bf16.msra.mxu0 %v988
    %1025 = vmatprep.subr.bf16.mxu0 0
    %1026 = vmatpush1.bf16.msra.mxu0 %v989
    %1027 = vmatprep.subr.bf16.mxu0 0
    %1028 = vmatpush1.bf16.msra.mxu0 %v990
    %1029 = vmatprep.mubr.bf16.mxu0 %v992
    %1030 = vmatmul.mubr.bf16.gmra.mrb[0].mxu0 %v991
    %v1031 = vpop.f32.mrb[0].mxu0
    %v1032 = vadd.f32 %v996, %v1031
    %v1033 = vpop.f32.mrb[0].mxu0
    %v1034 = vpop.f32.mrb[0].mxu0
    %v1035 = vadd.f32 %v996, %v1034
    %v1036 = vpop.f32.mrb[0].mxu0
    %1037 = vdwg.mxu0
    %1038 = vmax.xlane.f32.xlu0 %v1032
    %v1039 = vpop.xlane.xlu0 %1038
    %1040 = vmax.xlane.f32.xlu0 %v1035
    %v1041 = vpop.xlane.xlu0 %1040
    %v1042 = vsub.f32 %v1032, %v1039
    %v1043 = vsub.f32 %v1035, %v1041
    %v1044 = vmul.f32 %v1042, 1.442695
    %v1045 = vpow.pop %v1044
    %v1046 = vmul.f32 %v1043, 1.442695
    %v1047 = vpow.pop %v1046
    %1048 = vadd.xlane.f32.xlu0 %v1045
    %v1049 = vpop.xlane.xlu0 %1048
    %1050 = vadd.xlane.f32.xlu0 %v1047
    %v1051 = vpop.xlane.xlu0 %1050
    %v1052 = vrcp.pop %v1049
    %v1053 = vmul.f32 %v1045, %v1052
    %v1054 = vrcp.pop %v1051
    %v1055 = vmul.f32 %v1047, %v1054
    %1056 = vst [vmem:[#allocation11] sm:$0xff] %v1053
    %1057 = vst [vmem:[#allocation11 + $0x8] sm:$0xff] %v1055
    // Predicated region
    $region34: #{tpu_custom_call.1} parent=1 // pred_check
      _
    $region35: #{tpu_custom_call.1} parent=1 // pred_check_branch
      %1059 = sbr.rel (0) target = $region37
    $region36: #{tpu_custom_call.1} parent=1 // pred_region
      %s1061 = ssub.s32 256, 256
      %1062 = vsyncadd [#allocation7], %s1061
      %s1063 = sshll.u32 [#allocation11], 4
      %s1064 = int_to_ptr.vmem [resolvable:$true] %s1063
      %1069 = dma.vmem_to_hbm [thread:$0]  %s1064, 256, %s6, [#allocation7], 128, 128, 8
    $region37: #{tpu_custom_call.1} parent=1 // pred_fallthru
      _
    // Predicated region
    $region38: #{tpu_custom_call.1} parent=1 // pred_check
      _
    $region39: #{tpu_custom_call.1} parent=1 // pred_check_branch
      %1071 = sbr.rel (0) target = $region41
    $region40: #{tpu_custom_call.1} parent=1 // pred_region
      %1072 = dma.done [#allocation7], 256
    $region41: #{tpu_custom_call.1} parent=1 // pred_fallthru
      _
    %1073 = vsyncpa [#allocation6], 1
    %1074 = vsyncpa [#allocation9], 1
    %1075 = vsyncpa [#allocation7], 1
  %1076 = vsyncmov [#allocation4]
  %s1077 = vpop.sfrf %1076
  %p1078 = scmp.eq.s32.totalorder %s1077, 0
  %p1079 = pneg %p1078
  %1081 = shalt.err (%p1079)
  %s1082 = scalar_lea.sflag [#allocation4], 1
  %1083 = vsyncmov %s1082
  %s1084 = vpop.sfrf %1083
  %p1085 = scmp.eq.s32.totalorder %s1084, 0
  %p1086 = pneg %p1085
  %1088 = shalt.err (%p1086)

</llo_original>
